<compile_context>
chip_gen: v7x
topology: tpu7x:2x2x1
jax: 0.10.0
libtpu: 0.0.40
codegen_flags: <defaults>
</compile_context>

<pallas_src>
import numpy as np
import jax
import jax.numpy as jnp
from jax.experimental import pallas as pl
from jax.experimental.pallas import tpu as pltpu


# ----------------------------------------------------------------------------
# Helpers mirroring the PyTorch module structure
# ----------------------------------------------------------------------------
def dimension_split(d, m):
    reminder = d % m
    quotient = d // m
    widths = [quotient + 1 if i < reminder else quotient for i in range(m)]
    ds = np.cumsum(widths)
    ds = np.insert(ds, 0, 0)
    return ds


def init_params(key, d_input, depth, m, ks):
    """Deterministic parameters for the depth*m Linear(group_dim -> ks) layers."""
    ds = dimension_split(d_input, m)
    weights, biases = [], []
    for _d in range(depth):
        for i in range(m):
            cg = int(ds[i + 1] - ds[i])
            key, kw_, kb_ = jax.random.split(key, 3)
            w = jax.random.normal(kw_, (ks, cg), jnp.float32) * 0.5      # (out=ks, in=cg)
            b = jax.random.normal(kb_, (ks,), jnp.float32) * 0.5
            # Snap to the bf16 grid so bf16 MXU passes introduce no extra error.
            weights.append(w.astype(jnp.bfloat16).astype(jnp.float32))
            biases.append(b.astype(jnp.bfloat16).astype(jnp.float32))
    return ds, weights, biases


def pack_params(ds, weights, biases, d_input, depth, m, ks):
    """Offline fold: fuse group weights/biases and the product_add selector
    into a single (d_input, ks**(m*depth)) weight and (1, ks**(m*depth)) bias."""
    dm = depth * m
    dmks = dm * ks
    ktot = ks ** dm
    w_all = np.zeros((d_input, dmks), np.float32)
    b_all = np.zeros((dmks,), np.float32)
    for d in range(depth):
        for i in range(m):
            j = d * m + i
            lo, hi = int(ds[i]), int(ds[i + 1])
            w_all[lo:hi, j * ks:(j + 1) * ks] = np.asarray(weights[j]).T   # (cg, ks)
            b_all[j * ks:(j + 1) * ks] = np.asarray(biases[j])
    # Selector: out[:, J] = sum_j act_j[:, digit_j(J)], linear j=0 most significant.
    s = np.zeros((dmks, ktot), np.float32)
    big_j = np.arange(ktot)
    for j in range(dm):
        digit = (big_j // (ks ** (dm - 1 - j))) % ks
        s[j * ks + digit, big_j] = 1.0
    w_fused = w_all @ s                       # (d_input, ktot)
    b_fused = (b_all @ s).reshape(1, ktot)    # (1, ktot)
    return jnp.asarray(w_fused), jnp.asarray(b_fused)


# ----------------------------------------------------------------------------
# Pallas kernel: one bf16 MXU matmul + f32 bias add per (row-tile, col-tile)
# ----------------------------------------------------------------------------
def aqlinear_kernel(x_ref, w_ref, b_ref, o_ref):
    # x_ref: (Bt, Din) bf16; w_ref: (Din, Kt) bf16; b_ref: (1, Kt) f32; o_ref: (Bt, Kt) f32
    o_ref[...] = (
        jnp.dot(x_ref[...], w_ref[...], preferred_element_type=jnp.float32)
        + b_ref[...]
    )


def aqlinear_forward(x, w_fused, b_fused, *, block_rows=256, block_cols=128):
    n, din = x.shape
    ktot = w_fused.shape[1]

    # bf16 operands at the pallas_call boundary (native MXU passes, half DMA bytes).
    xb = x.astype(jnp.bfloat16)
    wb = w_fused.astype(jnp.bfloat16)

    # Row tile: all rows per step if they fit, rounded to a sublane multiple of 8.
    bt = min(block_rows, max(8, ((n + 7) // 8) * 8))
    bt = ((bt + 7) // 8) * 8
    n_pad = ((n + bt - 1) // bt) * bt
    if n_pad != n:
        xb = jnp.pad(xb, ((0, n_pad - n), (0, 0)))

    # Column tile: lane-dense multiple of 128 (keeps >= 2 parallel steps at this
    # config so both v7x TensorCores get work); full ktot if it isn't 128-aligned.
    if ktot % 128 == 0:
        kt = max(128, (min(block_cols, ktot) // 128) * 128)
        while ktot % kt != 0:
            kt -= 128
    else:
        kt = ktot

    grid = (n_pad // bt, ktot // kt)
    out = pl.pallas_call(
        aqlinear_kernel,
        out_shape=jax.ShapeDtypeStruct((n_pad, ktot), jnp.float32),
        grid_spec=pltpu.PrefetchScalarGridSpec(
            num_scalar_prefetch=0,
            grid=grid,
            in_specs=[
                pl.BlockSpec((bt, din), lambda r, c: (r, 0)),
                pl.BlockSpec((din, kt), lambda r, c: (0, c)),
                pl.BlockSpec((1, kt), lambda r, c: (0, c)),
            ],
            out_specs=pl.BlockSpec((bt, kt), lambda r, c: (r, c)),
        ),
        compiler_params=pltpu.CompilerParams(
            dimension_semantics=("parallel", "parallel"),
            # vmem_limit_bytes can be raised here for scaled-up configs (v5e/v6e);
            # the default is ample for this block size.
        ),
    )(xb, wb, b_fused)
    return out[:n]


# ----------------------------------------------------------------------------
# Pure-JAX reference (mirrors the PyTorch forward exactly)
# ----------------------------------------------------------------------------
def product_add_ref(xs, m, ks):
    n = xs[0].shape[0]
    total = jnp.zeros((n,) + (ks,) * m, xs[0].dtype)
    for i, xi in enumerate(xs):
        shape = [n] + [1] * m
        shape[1 + i] = ks
        total = total + xi.reshape(shape)
    return total.reshape(n, ks ** m)


def reference_forward(x, ds, weights, biases, depth, m, ks):
    pq_outs = []
    for d in range(depth):
        outs = []
        for i in range(m):
            j = d * m + i
            xg = x[:, int(ds[i]):int(ds[i + 1])]
            outs.append(xg @ weights[j].T + biases[j][None, :])
        pq_outs.append(product_add_ref(outs, m, ks))
    return product_add_ref(pq_outs, depth, ks ** m)


# ----------------------------------------------------------------------------
if __name__ == "__main__":
    # Small config: AQLinear(d_input=32, d_output=256, m=2, depth=2, ks=4)
    N, DIN = 8, 32
    depth, m, ks = 2, 2, 4
    d_output = ks ** (m * depth)   # 256

    key = jax.random.PRNGKey(0)
    key, kx = jax.random.split(key)
    x = jax.random.normal(kx, (N, DIN), jnp.float32)
    x = x.astype(jnp.bfloat16).astype(jnp.float32)   # bf16-snapped activations

    ds, weights, biases = init_params(key, DIN, depth, m, ks)
    w_fused, b_fused = pack_params(ds, weights, biases, DIN, depth, m, ks)

    out = aqlinear_forward(x, w_fused, b_fused)
    out = jax.block_until_ready(out)
    assert out.shape == (N, d_output), out.shape

    ref = reference_forward(x, ds, weights, biases, depth, m, ks)
    max_err = float(jnp.max(jnp.abs(out - ref)))
    scale = float(jnp.max(jnp.abs(ref))) + 1e-6
    if max_err > 1e-2 * scale:
        raise AssertionError(f"mismatch vs reference: max_err={max_err}, scale={scale}")
    print("KERNEL_OK")
</pallas_src>

<mosaic_0001>
module attributes {stable_mosaic.version = 11 : i64} {
  func.func @aqlinear_kernel(%arg0: i32, %arg1: i32, %arg2: memref<8x32xbf16, #tpu.memory_space<vmem>>, %arg3: memref<32x128xbf16, #tpu.memory_space<vmem>>, %arg4: memref<1x128xf32, #tpu.memory_space<vmem>>, %arg5: memref<8x128xf32, #tpu.memory_space<vmem>>) attributes {dimension_semantics = [#tpu.dimension_semantics<parallel>, #tpu.dimension_semantics<parallel>], iteration_bounds = array<i64: 1, 2>, scalar_prefetch = 0 : i64, scratch_operands = 0 : i64, tpu.core_type = #tpu.core_type<tc>, window_params = [{transform_indices = @transform_0, window_bounds = array<i64: 8, 32>}, {transform_indices = @transform_1, window_bounds = array<i64: 32, 128>}, {transform_indices = @transform_2, window_bounds = array<i64: 1, 128>}, {transform_indices = @transform_3, window_bounds = array<i64: 8, 128>}]} {
    %c0 = arith.constant 0 : index
    %c0_0 = arith.constant 0 : index
    %0 = vector.load %arg2[%c0, %c0_0] : memref<8x32xbf16, #tpu.memory_space<vmem>>, vector<8x32xbf16>
    %c0_1 = arith.constant 0 : index
    %c0_2 = arith.constant 0 : index
    %1 = vector.load %arg3[%c0_1, %c0_2] : memref<32x128xbf16, #tpu.memory_space<vmem>>, vector<32x128xbf16>
    %cst = arith.constant dense<0.000000e+00> : vector<8x128xf32>
    %2 = tpu.matmul %0, %1, %cst {dimension_numbers = #tpu.dot_dimension_numbers<[1], [0], [0], [1], [0, 0, 1, 1], [], []>} : vector<8x32xbf16>, vector<32x128xbf16>, vector<8x128xf32> -> vector<8x128xf32>
    %c0_3 = arith.constant 0 : index
    %c0_4 = arith.constant 0 : index
    %3 = vector.load %arg4[%c0_3, %c0_4] : memref<1x128xf32, #tpu.memory_space<vmem>>, vector<1x128xf32>
    %4 = vector.broadcast %3 : vector<1x128xf32> to vector<8x128xf32>
    %5 = arith.addf %2, %4 : vector<8x128xf32>
    %c0_5 = arith.constant 0 : index
    %c0_6 = arith.constant 0 : index
    %6 = vector.load %arg5[%c0_5, %c0_6] : memref<8x128xf32, #tpu.memory_space<vmem>>, vector<8x128xf32>
    tpu.vector_store %arg5[%c0_5, %c0_6], %5 {strides = array<i32>} : memref<8x128xf32, #tpu.memory_space<vmem>>, vector<8x128xf32>,
    return
  }
  func.func @transform_0(%arg0: i32, %arg1: i32) -> (i32, i32) {
    %c0_i32 = arith.constant 0 : i32
    %c0_i32_0 = arith.constant 0 : i32
    return %arg0, %c0_i32 : i32, i32
  }
  func.func @transform_1(%arg0: i32, %arg1: i32) -> (i32, i32) {
    %c0_i32 = arith.constant 0 : i32
    %c0_i32_0 = arith.constant 0 : i32
    return %c0_i32, %arg1 : i32, i32
  }
  func.func @transform_2(%arg0: i32, %arg1: i32) -> (i32, i32) {
    %c0_i32 = arith.constant 0 : i32
    %c0_i32_0 = arith.constant 0 : i32
    return %c0_i32, %arg1 : i32, i32
  }
  func.func @transform_3(%arg0: i32, %arg1: i32) -> (i32, i32) {
    %c0_i32 = arith.constant 0 : i32
    return %arg0, %arg1 : i32, i32
  }
}

</mosaic_0001>

<llo_original>
// kernel: tpu_custom_call.1
$region0: #{tpu_custom_call.1}
  #allocation0 [shape = 'u32[]', space=smem, size = 0x4, offset = 0x4, fixed_abs, tag = 'smem constant byte address 0x4 - core index']
  #allocation1 [shape = 'u32[144,128]{1,0:T(1,128)}', space=vmem, size = 0x12000, scoped, tag = 'internal scratch']
  %s0 = inlined_call_operand.hbm [shape: bf16[8,32], index: 0, kind: input, shape index: {}]
  %s1 = inlined_call_operand.hbm [shape: bf16[32,256], index: 1, kind: input, shape index: {}]
  %s2 = inlined_call_operand.vmem [shape: f32[1,256], index: 2, kind: input, shape index: {}]
  %s3 = inlined_call_operand.hbm [shape: f32[8,256], index: 3, kind: output, shape index: {}]
  %s4 = sld [smem:[#allocation0]]
  $region53: #{tpu_custom_call.1} parent=0
    _
  %s6 = ssub.s32 1, %s4
  %s7 = scalar_select 0, %s6, %s4
  $region1: #{tpu_custom_call.1} parent=0
    #allocation2 [shape = 'u8[2048]{0}', space=vmem, size = 0x800, scoped, tag = 'input window, operand 0, single buffered']
    #allocation3 [shape = 's32[2]{0}', space=sflag, size = 0x8, scoped, tag = 'scoped memory for tpu_custom_call.1']
    #allocation4 [shape = 's32[2]{0}', space=sflag, size = 0x8, scoped, tag = 'scoped memory for tpu_custom_call.1']
    #allocation5 [shape = 'u8[16384]{0}', space=vmem, size = 0x4000, scoped, tag = 'input window, operand 1']
    #allocation6 [shape = 's32[2]{0}', space=sflag, size = 0x8, scoped, tag = 'scoped memory for tpu_custom_call.1']
    #allocation7 [shape = 'u8[8192]{0}', space=vmem, size = 0x2000, scoped, tag = 'output window, operand 0']
    %8 = vsyncpa [#allocation3], 0
    %9 = vsyncpa [#allocation6], 0
    %s10 = scalar_lea.sflag [#allocation6], 1
    %11 = vsyncpa %s10, 0
    %12 = vsyncpa [#allocation4], 0
    %s13 = scalar_lea.sflag [#allocation4], 1
    %14 = vsyncpa %s13, 0
    loop: start=0, step=1, limit=4
    $region2: #{tpu_custom_call.1} parent=1 // loop_pre_header
      _
    $region3: #{tpu_custom_call.1} parent=1 // loop_header
      %s16 = sphi 0, %s20
      %p17 = scmp.ge.s32.totalorder %s16, 4
      %s23 = sphi 0, %s35
      %s24 = sphi 0, %s31
      %s25 = sphi 0, %s23
      %s26 = sphi 0, %s24
      %s27 = sphi 0, %s25
      %s28 = sphi 0, %s26
      %s38 = sphi 0, %s40
      %s41 = sphi 0, %s38
      %s42 = sphi 0, %s41
      %s58 = sphi 0, %s42
      %s64 = sphi 0, %s66
      %s67 = sphi 0, %s64
      %s68 = sphi 0, %s67
      %s84 = sphi 0, %s68
      %s90 = sphi 0, %s92
      %s93 = sphi 0, %s90
      %s94 = sphi 0, %s93
      %s110 = sphi 0, %s94
      %s118 = sphi 0, %s120
      %s121 = sphi 0, %s118
      %s122 = sphi 0, %s121
      %s138 = sphi 0, %s122
    $region4: #{tpu_custom_call.1} parent=1 // loop_header_branch
      %19 = sbr.rel (%p17) target = $region8
    $region5: #{tpu_custom_call.1} parent=1 // loop_body
      %s21 = ssub.s32 %s16, 1
      %s22 = ssub.s32 %s16, 2
      %s29 = sadd.s32 1, %s24
      %p30 = scmp.ge.s32.totalorder %s29, 2
      %s31 = scalar_select %p30, 0, %s29
      %s32 = sadd.s32 1, %s23
      %s33 = scalar_select %p30, %s32, %s23
      %p34 = scmp.ge.s32.totalorder %s33, 1
      %s35 = scalar_select %p34, 0, %s33
      %s36 = ssub.s32 %s23, %s35
      %p37 = scmp.eq.s32.totalorder %s36, 0
      %s39 = sadd.s32 %s38, 1
      %s40 = scalar_select %p37, %s38, %s39
      %p43 = pneg %p37
      %p44 = scmp.eq.s32.totalorder %s16, 1
      %p45 = por %p43, %p44
      %p46 = scmp.ne.s32.totalorder %s38, %s41
      %p47 = scmp.eq.s32.totalorder %s16, 0
      %p48 = por %p46, %p47
      %p49 = scmp.ne.s32.totalorder %s38, %s41
      %p50 = scmp.eq.s32.totalorder %s21, 1
      %p51 = por %p49, %p50
      %p52 = scmp.ne.s32.totalorder %s41, %s42
      %p53 = scmp.eq.s32.totalorder %s21, 0
      %p54 = por %p52, %p53
      %p55 = scmp.ne.s32.totalorder %s41, %s42
      %p56 = scmp.eq.s32.totalorder %s22, 1
      %p57 = por %p55, %p56
      %p59 = scmp.ne.s32.totalorder %s42, %s58
      %p60 = scmp.eq.s32.totalorder %s22, 0
      %p61 = por %p59, %p60
      %s62 = ssub.s32 %s24, %s31
      %p63 = scmp.eq.s32.totalorder %s62, 0
      %s65 = sadd.s32 %s64, 1
      %s66 = scalar_select %p63, %s64, %s65
      %p69 = pneg %p63
      %p70 = scmp.eq.s32.totalorder %s16, 1
      %p71 = por %p69, %p70
      %p72 = scmp.ne.s32.totalorder %s64, %s67
      %p73 = scmp.eq.s32.totalorder %s16, 0
      %p74 = por %p72, %p73
      %p75 = scmp.ne.s32.totalorder %s64, %s67
      %p76 = scmp.eq.s32.totalorder %s21, 1
      %p77 = por %p75, %p76
      %p78 = scmp.ne.s32.totalorder %s67, %s68
      %p79 = scmp.eq.s32.totalorder %s21, 0
      %p80 = por %p78, %p79
      %p81 = scmp.ne.s32.totalorder %s67, %s68
      %p82 = scmp.eq.s32.totalorder %s22, 1
      %p83 = por %p81, %p82
      %p85 = scmp.ne.s32.totalorder %s68, %s84
      %p86 = scmp.eq.s32.totalorder %s22, 0
      %p87 = por %p85, %p86
      %s88 = ssub.s32 %s24, %s31
      %p89 = scmp.eq.s32.totalorder %s88, 0
      %s91 = sadd.s32 %s90, 1
      %s92 = scalar_select %p89, %s90, %s91
      %p95 = pneg %p89
      %p96 = scmp.eq.s32.totalorder %s16, 1
      %p97 = por %p95, %p96
      %p98 = scmp.ne.s32.totalorder %s90, %s93
      %p99 = scmp.eq.s32.totalorder %s16, 0
      %p100 = por %p98, %p99
      %p101 = scmp.ne.s32.totalorder %s90, %s93
      %p102 = scmp.eq.s32.totalorder %s21, 1
      %p103 = por %p101, %p102
      %p104 = scmp.ne.s32.totalorder %s93, %s94
      %p105 = scmp.eq.s32.totalorder %s21, 0
      %p106 = por %p104, %p105
      %p107 = scmp.ne.s32.totalorder %s93, %s94
      %p108 = scmp.eq.s32.totalorder %s22, 1
      %p109 = por %p107, %p108
      %p111 = scmp.ne.s32.totalorder %s94, %s110
      %p112 = scmp.eq.s32.totalorder %s22, 0
      %p113 = por %p111, %p112
      %s114 = ssub.s32 %s23, %s35
      %s115 = ssub.s32 %s24, %s31
      %s116 = sor.u32 %s114, %s115
      %p117 = scmp.eq.s32.totalorder %s116, 0
      %s119 = sadd.s32 %s118, 1
      %s120 = scalar_select %p117, %s118, %s119
      %p123 = pneg %p117
      %p124 = scmp.eq.s32.totalorder %s16, 1
      %p125 = por %p123, %p124
      %p126 = scmp.ne.s32.totalorder %s118, %s121
      %p127 = scmp.eq.s32.totalorder %s16, 0
      %p128 = por %p126, %p127
      %p129 = scmp.ne.s32.totalorder %s118, %s121
      %p130 = scmp.eq.s32.totalorder %s21, 1
      %p131 = por %p129, %p130
      %p132 = scmp.ne.s32.totalorder %s121, %s122
      %p133 = scmp.eq.s32.totalorder %s21, 0
      %p134 = por %p132, %p133
      %p135 = scmp.ne.s32.totalorder %s121, %s122
      %p136 = scmp.eq.s32.totalorder %s22, 1
      %p137 = por %p135, %p136
      %p139 = scmp.ne.s32.totalorder %s122, %s138
      %p140 = scmp.eq.s32.totalorder %s22, 0
      %p141 = por %p139, %p140
      %p142 = scmp.le.s32.totalorder 1, %s16
      %p143 = scmp.lt.s32.totalorder %s16, 3
      %p144 = pnand %p142, %p143
      %p145 = pneg %p144
      // Predicated region
      $region9: #{tpu_custom_call.1} parent=5 // pred_check
        _
      $region10: #{tpu_custom_call.1} parent=5 // pred_check_branch
        %147 = sbr.rel (%p144) target = $region12
      $region11: #{tpu_custom_call.1} parent=5 // pred_region
        %s148 = ssub.s32 %s16, 1
        // Predicated region
        $region13: #{tpu_custom_call.1} parent=11 // pred_check
          %p149 = pneg %p54
        $region14: #{tpu_custom_call.1} parent=11 // pred_check_branch
          %151 = sbr.rel (%p149) target = $region16
        $region15: #{tpu_custom_call.1} parent=11 // pred_region
          %s153 = ssub.s32 64, 64
          %154 = vsyncadd [#allocation3], %s153
          %s155 = smul.addr %s25, 64
          %s156 = scalar_lea.hbm %s0, %s155
          %s158 = sshll.u32 [#allocation2], 4
          %s159 = int_to_ptr.vmem [resolvable:$true] %s158
          %161 = dma.hbm_to_vmem [thread:$0]  %s156, 64, %s159, [#allocation3]
        $region16: #{tpu_custom_call.1} parent=11 // pred_fallthru
          _
      $region12: #{tpu_custom_call.1} parent=5 // pred_fallthru
        _
      %p162 = scmp.lt.s32.totalorder %s16, 2
      // Predicated region
      $region17: #{tpu_custom_call.1} parent=5 // pred_check
        %p163 = pneg %p162
      $region18: #{tpu_custom_call.1} parent=5 // pred_check_branch
        %165 = sbr.rel (%p163) target = $region20
      $region19: #{tpu_custom_call.1} parent=5 // pred_region
        // Predicated region
        $region21: #{tpu_custom_call.1} parent=19 // pred_check
          %p166 = pneg %p74
        $region22: #{tpu_custom_call.1} parent=19 // pred_check_branch
          %168 = sbr.rel (%p166) target = $region24
        $region23: #{tpu_custom_call.1} parent=19 // pred_region
          %s169 = sand.u32 %s64, 1
          %s170 = scalar_lea.sflag [#allocation6], %s169
          %s171 = sand.u32 %s64, 1
          %s172 = smul.addr %s171, 16
          %s173 = scalar_lea.vmem [#allocation5], %s172
          %s175 = ssub.s32 256, 256
          %176 = vsyncadd %s170, %s175
          %s177 = smul.addr %s24, 64
          %s178 = scalar_lea.hbm %s1, %s177
          %s179 = sshll.u32 %s173, 4
          %s180 = int_to_ptr.vmem [resolvable:$true] %s179
          %185 = dma.hbm_to_vmem [thread:$0]  %s178, 256, %s180, %s170, 128, 64, 4
        $region24: #{tpu_custom_call.1} parent=19 // pred_fallthru
          _
        // Predicated region
        $region25: #{tpu_custom_call.1} parent=19 // pred_check
          %p186 = pneg %p100
        $region26: #{tpu_custom_call.1} parent=19 // pred_check_branch
          %188 = sbr.rel (%p186) target = $region28
        $region27: #{tpu_custom_call.1} parent=19 // pred_region
          %p189 = scmp.lt.s32.totalorder %s24, 1
          %s190 = scalar_select %p189, %s24, 1
          %s191 = scalar_lea.vmem %s2, %s190
        $region28: #{tpu_custom_call.1} parent=19 // pred_fallthru
          _
      $region20: #{tpu_custom_call.1} parent=5 // pred_fallthru
        _
      %p192 = scmp.le.s32.totalorder 1, %s16
      %p193 = scmp.lt.s32.totalorder %s16, 3
      %p194 = pnand %p192, %p193
      %p195 = pneg %p194
      // Predicated region
      $region29: #{tpu_custom_call.1} parent=5 // pred_check
        _
      $region30: #{tpu_custom_call.1} parent=5 // pred_check_branch
        %197 = sbr.rel (%p194) target = $region32
      $region31: #{tpu_custom_call.1} parent=5 // pred_region
        %s198 = ssub.s32 %s16, 1
        // Predicated region
        $region33: #{tpu_custom_call.1} parent=31 // pred_check
          %p199 = pneg %p54
        $region34: #{tpu_custom_call.1} parent=31 // pred_check_branch
          %201 = sbr.rel (%p199) target = $region36
        $region35: #{tpu_custom_call.1} parent=31 // pred_region
          %202 = dma.done [#allocation3], 64
        $region36: #{tpu_custom_call.1} parent=31 // pred_fallthru
          _
        %s203 = sand.u32 %s67, 1
        %s204 = scalar_lea.sflag [#allocation6], %s203
        %s205 = sand.u32 %s67, 1
        %s206 = smul.addr %s205, 16
        %s207 = scalar_lea.vmem [#allocation5], %s206
        // Predicated region
        $region37: #{tpu_custom_call.1} parent=31 // pred_check
          %p208 = pneg %p80
        $region38: #{tpu_custom_call.1} parent=31 // pred_check_branch
          %210 = sbr.rel (%p208) target = $region40
        $region39: #{tpu_custom_call.1} parent=31 // pred_region
          %211 = dma.done %s204, 256
        $region40: #{tpu_custom_call.1} parent=31 // pred_fallthru
          _
        %p212 = pneg %p54
        %p213 = pneg %p51
        %s214 = sand.u32 %s67, 1
        %s215 = scalar_lea.sflag [#allocation6], %s214
        %s216 = sand.u32 %s67, 1
        %s217 = smul.addr %s216, 16
        %s218 = scalar_lea.vmem [#allocation5], %s217
        %p219 = pneg %p80
        %p220 = pneg %p77
        %p221 = scmp.lt.s32.totalorder %s26, 1
        %s222 = scalar_select %p221, %s26, 1
        %s223 = scalar_lea.vmem %s2, %s222
        %p224 = pneg %p106
        %p225 = pneg %p103
        %p226 = pneg %p134
        %p227 = pneg %p131
        %s228 = sand.u32 %s121, 1
        %s229 = scalar_lea.sflag [#allocation4], %s228
        %s230 = sand.u32 %s121, 1
        %s231 = smul.addr %s230, 8
        %s232 = scalar_lea.vmem [#allocation7], %s231
        %p233 = scmp.lt.s32.totalorder %s26, 1
        %s234 = scalar_select %p233, %s26, 1
        %s235 = scalar_lea.vmem %s2, %s234
        %v237 = vld [vmem:[#allocation2] sm:$0xf]
        %v238 = vld [vmem:[%s207] sm:$0xf]
        %v239 = vld [vmem:[%s207 + $0x4] sm:$0xf]
        %v240 = vld [vmem:[%s207 + $0x8] sm:$0xf]
        %v241 = vld [vmem:[%s207 + $0xc] sm:$0xf]
        %v242 = vld [vmem:[%s235] sm:$0x1]
        %v244 = vlaneseq
        %v245 = vshrl.u32 %v244, 7
        %v246 = vsub.s32 0, %v245
        %v247 = vrot.slane %v242, %v246
        %v253 = vunpack.c.l.b16 %v238
        %v254 = vunpack.c.l.b16 %v239
        %v255 = vunpack.c.l.b16 %v240
        %v256 = vunpack.c.l.b16 %v241
        %v257 = vpack.c.b16 %v254, %v253
        %v258 = vpack.c.b16 %v256, %v255
        %vm261 = vcmask 261120
        %v263 = vsel %vm261, %v237, 0
        %265 = vmatprep.subr.bf16.mxu0 0
        %266 = vmatpush1.bf16.msra.mxu0 %v257
        %267 = vmatprep.subr.bf16.mxu0 0
        %268 = vmatpush1.bf16.msra.mxu0 %v258
        %269 = vmatprep.subr.bf16.mxu0 0
        %270 = vmatpush1.bf16.msra.mxu0 0
        %271 = vmatprep.subr.bf16.mxu0 0
        %272 = vmatpush1.bf16.msra.mxu0 0
        %273 = vmatprep.subr.bf16.mxu0 0
        %274 = vmatpush1.bf16.msra.mxu0 0
        %275 = vmatprep.subr.bf16.mxu0 0
        %276 = vmatpush1.bf16.msra.mxu0 0
        %277 = vmatprep.subr.bf16.mxu0 0
        %278 = vmatpush1.bf16.msra.mxu0 0
        %279 = vmatprep.subr.bf16.mxu0 0
        %280 = vmatpush1.bf16.msra.mxu0 0
        %281 = vmatprep.subr.bf16.mxu0 0
        %282 = vmatpush1.bf16.msra.mxu0 0
        %283 = vmatprep.subr.bf16.mxu0 0
        %284 = vmatpush1.bf16.msra.mxu0 0
        %285 = vmatprep.subr.bf16.mxu0 0
        %286 = vmatpush1.bf16.msra.mxu0 0
        %287 = vmatprep.subr.bf16.mxu0 0
        %288 = vmatpush1.bf16.msra.mxu0 0
        %289 = vmatprep.subr.bf16.mxu0 0
        %290 = vmatpush1.bf16.msra.mxu0 0
        %291 = vmatprep.subr.bf16.mxu0 0
        %292 = vmatpush1.bf16.msra.mxu0 0
        %293 = vmatprep.subr.bf16.mxu0 0
        %294 = vmatpush1.bf16.msra.mxu0 0
        %295 = vmatprep.subr.bf16.mxu0 0
        %296 = vmatpush1.bf16.msra.mxu0 0
        %297 = vmatprep.mubr.bf16.mxu0 0
        %298 = vmatmul.mubr.bf16.gmra.mrb[0].mxu0 %v263
        %v299 = vpop.f32.mrb[0].mxu0
        %v300 = vadd.f32 %v247, %v299
        %v301 = vpop.f32.mrb[0].mxu0
        %v302 = vpop.f32.mrb[0].mxu0
        %v303 = vpop.f32.mrb[0].mxu0
        %304 = vdwg.mxu0
        %305 = vst [vmem:[%s232] sm:$0xff] %v300
        %s306 = sand.u32 %s121, 1
        %s307 = scalar_lea.sflag [#allocation4], %s306
        %s308 = sand.u32 %s121, 1
        %s309 = smul.addr %s308, 8
        %s310 = scalar_lea.vmem [#allocation7], %s309
        // Predicated region
        $region41: #{tpu_custom_call.1} parent=31 // pred_check
          %p311 = pneg %p131
        $region42: #{tpu_custom_call.1} parent=31 // pred_check_branch
          %313 = sbr.rel (%p311) target = $region44
        $region43: #{tpu_custom_call.1} parent=31 // pred_region
          %s315 = ssub.s32 128, 128
          %316 = vsyncadd %s307, %s315
          %s317 = smul.addr %s25, 2
          %s318 = sadd.s32 %s26, %s317
          %s319 = smul.addr %s318, 128
          %s320 = scalar_lea.hbm %s3, %s319
          %s322 = sshll.u32 %s310, 4
          %s323 = int_to_ptr.vmem [resolvable:$true] %s322
          %325 = dma.vmem_to_hbm [thread:$0]  %s323, 128, %s320, %s307
        $region44: #{tpu_custom_call.1} parent=31 // pred_fallthru
          _
      $region32: #{tpu_custom_call.1} parent=5 // pred_fallthru
        _
      %p326 = scmp.le.s32.totalorder 2, %s16
      // Predicated region
      $region45: #{tpu_custom_call.1} parent=5 // pred_check
        %p327 = pneg %p326
      $region46: #{tpu_custom_call.1} parent=5 // pred_check_branch
        %329 = sbr.rel (%p327) target = $region48
      $region47: #{tpu_custom_call.1} parent=5 // pred_region
        %s330 = ssub.s32 %s16, 2
        // Predicated region
        $region49: #{tpu_custom_call.1} parent=47 // pred_check
          %p331 = pneg %p137
        $region50: #{tpu_custom_call.1} parent=47 // pred_check_branch
          %333 = sbr.rel (%p331) target = $region52
        $region51: #{tpu_custom_call.1} parent=47 // pred_region
          %s334 = sand.u32 %s122, 1
          %s335 = scalar_lea.sflag [#allocation4], %s334
          %s336 = sand.u32 %s122, 1
          %s337 = smul.addr %s336, 8
          %s338 = scalar_lea.vmem [#allocation7], %s337
          %339 = dma.done %s335, 128
        $region52: #{tpu_custom_call.1} parent=47 // pred_fallthru
          _
      $region48: #{tpu_custom_call.1} parent=5 // pred_fallthru
        _
    $region6: #{tpu_custom_call.1} parent=1 // loop_footer
      %s20 = sadd.s32 1, %s16
    $region7: #{tpu_custom_call.1} parent=1 // loop_footer_branch
      %15 = sbr.rel target = $region3
    $region8: #{tpu_custom_call.1} parent=1 // loop_exit
      _
    %340 = vsyncpa [#allocation3], 1
    %s341 = scalar_lea.sflag [#allocation3], 1
    %342 = vsyncpa %s341, 1
    %343 = vsyncpa [#allocation6], 1
    %s344 = scalar_lea.sflag [#allocation6], 1
    %345 = vsyncpa %s344, 1
    %346 = vsyncpa [#allocation4], 1
    %s347 = scalar_lea.sflag [#allocation4], 1
    %348 = vsyncpa %s347, 1

</llo_original>
